<compile_context>
chip_gen: v5e
topology: v5e:2x2
jax: 0.10.0
libtpu: 0.0.40
codegen_flags: <defaults>
</compile_context>

<pallas_src>
import functools
import math

import jax
import jax.numpy as jnp
from jax.experimental import pallas as pl
from jax.experimental.pallas import tpu as pltpu


# ---------------------------------------------------------------------------
# Kernel
# ---------------------------------------------------------------------------

def _layer_conv(w_ref, b_ref, hidden, x0, h0p, tbd):
    """One CIN layer: y = relu(W @ z + b) with z = hidden (x) x0, for a batch tile.

    w_ref  : (n_chunks, S, ch*H0p)  mxu-dtype Conv1d weight, chunked along the
             hidden-rows (contraction) dimension.
    b_ref  : (S, 1) float32 bias.
    hidden : (HK, TB*D) mxu-dtype;  x0 : (H0p, TB*D) mxu-dtype.

    The z intermediate is only ever (ch*H0p, TB*D): chunk i+1's VPU/vst work can
    overlap the MXU streaming chunk i, and peak VMEM stays bounded.
    """
    n_chunks, s, chh = w_ref.shape
    ch = chh // h0p
    if n_chunks == 1:
        z = (hidden[:, None, :] * x0[None, :, :]).reshape(hidden.shape[0] * h0p, tbd)
        y = jnp.dot(w_ref[0], z, preferred_element_type=jnp.float32)
    else:
        def body(c, acc):
            hc = jax.lax.dynamic_slice_in_dim(hidden, c * ch, ch, axis=0)
            z = (hc[:, None, :] * x0[None, :, :]).reshape(ch * h0p, tbd)
            return acc + jnp.dot(w_ref[c], z, preferred_element_type=jnp.float32)
        y = jax.lax.fori_loop(0, n_chunks, body,
                              jnp.zeros((s, tbd), jnp.float32), unroll=True)
    return jnp.maximum(y + b_ref[...], 0.0)          # ReLU, f32


def _cin_kernel(x_ref, sel_ref, *refs, layer_size, split_half, featmap):
    """One batch-tile of the CIN forward.

    x_ref   : (H0p, TB*D)  input tile, batch folded into the lane axis (D innermost)
    sel_ref : (TB, TB*D)   block-diagonal per-batch-element D-reduction selector
    refs    : (w_0, b_0, w_1, b_1, ..., out_ref)
    out_ref : (TB, featmap_pad) float32
    """
    out_ref = refs[-1]
    wb = refs[:-1]
    n_layers = len(layer_size)

    x0 = x_ref[...]                         # (H0p, TB*D), mxu dtype (bf16 default)
    h0p, tbd = x0.shape
    mxu_dtype = x0.dtype
    sel = sel_ref[...]                      # (TB, TB*D), mxu dtype

    # Zero the lane-padding columns of the output block (sliced off in wrapper).
    if out_ref.shape[1] > featmap:
        out_ref[:, featmap:] = jnp.zeros(
            (out_ref.shape[0], out_ref.shape[1] - featmap), out_ref.dtype)

    hidden = x0
    off = 0
    for i, size in enumerate(layer_size):
        y = _layer_conv(wb[2 * i], wb[2 * i + 1], hidden, x0, h0p, tbd)  # (S, TB*D) f32
        if split_half and i != n_layers - 1:
            half = size // 2
            direct = y[half:, :]                         # direct_connect
            hidden = y[:half, :].astype(mxu_dtype)       # next_hidden
        else:
            direct = y
            if i != n_layers - 1:
                hidden = y.astype(mxu_dtype)
        s_dir = direct.shape[0]
        # Per-batch-element reduction over D (never an unmasked TB*D reduction):
        #   out[t, f] = sum_d direct[f, t*D + d] == (sel @ direct^T)[t, f]
        part = jax.lax.dot_general(sel, direct.astype(mxu_dtype),
                                   dimension_numbers=(((1,), (1,)), ((), ())),
                                   preferred_element_type=jnp.float32)
        out_ref[:, off:off + s_dir] = part               # static column offset
        off += s_dir


# ---------------------------------------------------------------------------
# Wrapper
# ---------------------------------------------------------------------------

def _choose_batch_tile(batch, d, target_lanes=1024, max_tb=1024, min_steps=2):
    """Batch tile TB: TB*D lane-aligned (mult. of 128), TB mult. of 8, and the
    grid has >= min_steps steps when the batch allows (v7x megacore)."""
    q = 128 // math.gcd(128, d)
    q = (q * 8) // math.gcd(q, 8)                     # also keep TB a multiple of 8
    tb = max(q, ((max(target_lanes, d * q) // d) // q) * q)
    tb = min(tb, max_tb)
    b_pad_q = ((batch + q - 1) // q) * q
    tb = min(tb, b_pad_q)
    while tb > q and pl.cdiv(batch, tb) < min_steps:
        tb = max(q, ((tb // 2) // q) * q)
    return tb


def _pick_chunk_rows(hk, h0p, tbd, itemsize, z_budget_bytes):
    """Chunk of hidden rows so the z intermediate stays under z_budget_bytes.
    Chunks (when used) stay multiples of 8 so dynamic slices are sublane-aligned."""
    ch = hk
    while (ch * h0p * tbd * itemsize > z_budget_bytes
           and ch % 2 == 0 and (ch // 2) % 8 == 0):
        ch //= 2
    return ch


def _pick_vmem_limit():
    try:
        cap = int(pltpu.get_tpu_info().vmem_capacity_bytes)
    except Exception:
        cap = 64 * 1024 * 1024
    return int(min(cap * 3 // 4, 96 * 1024 * 1024))


def cin_forward(inputs, weights, biases, layer_size, split_half=True,
                mxu_dtype=jnp.bfloat16, target_lanes=1024,
                z_chunk_bytes=4 * 1024 * 1024):
    """inputs: (B, field_size, D) float32. Returns (B, featuremap_num) float32.

    mxu_dtype=bf16 by default (full-rate MXU on v6e/v7x, half-width z/weights/
    input traffic); accumulation, bias and ReLU stay f32.  Use jnp.float32 to
    bit-match the f32 reference.
    """
    B, H0, D = inputs.shape
    n_layers = len(layer_size)
    if split_half:
        featmap = sum(layer_size[:-1]) // 2 + layer_size[-1]
    else:
        featmap = sum(layer_size)
    # Lane-dense output stores: pad small feature maps up to 128 lanes.
    featmap_pad = featmap if featmap >= 128 else ((featmap + 127) // 128) * 128

    h0p = ((H0 + 7) // 8) * 8            # sublane-align x0 rows -> relayout-free z reshape
    tb = _choose_batch_tile(B, D, target_lanes=target_lanes)
    steps = pl.cdiv(B, tb)
    bp = steps * tb
    tbd = tb * D

    # field_nums bookkeeping exactly as in the PyTorch __init__.
    field_nums = [H0]
    for size in layer_size:
        field_nums.append(size // 2 if split_half else size)
    # Kernel-side hidden row counts (layer 0's hidden is the padded x0).
    hk = [h0p] + field_nums[1:n_layers]

    # Cast to mxu dtype BEFORE the pad/fold so the extra HBM pass is half-width.
    x = inputs.astype(mxu_dtype)
    x = jnp.pad(x, ((0, bp - B), (0, h0p - H0), (0, 0)))
    # Fold batch into the lane axis: (B, H0p, D) -> (H0p, B*D), D innermost.
    # TODO(synk): this fold is still one wrapper-side HBM pass over the input.
    x_folded = jnp.transpose(x, (1, 0, 2)).reshape(h0p, bp * D)

    # Block-diagonal per-batch-element D-reduction selector, built once.
    sel = (jnp.arange(tbd, dtype=jnp.int32)[None, :] // D
           == jnp.arange(tb, dtype=jnp.int32)[:, None]).astype(mxu_dtype)

    itemsize = jnp.dtype(mxu_dtype).itemsize
    args = [x_folded, sel]
    in_specs = [pl.BlockSpec((h0p, tbd), lambda b: (0, b)),
                pl.BlockSpec((tb, tbd), lambda b: (0, 0))]
    for i, (w, bias) in enumerate(zip(weights, biases)):
        s = layer_size[i]
        # Conv1d weight (S, field_nums[i]*H0 [,1]) -> (S, HK_i, H0p), zero-padded:
        # padded rows/cols only ever meet zero activations, so they contribute 0.
        w3 = jnp.asarray(w, jnp.float32).reshape(s, field_nums[i], H0)
        w3 = jnp.pad(w3, ((0, 0), (0, hk[i] - field_nums[i]), (0, h0p - H0)))
        # Split the hidden-rows contraction into chunks for in-kernel z tiling;
        # chunk c owns weight columns [c*ch*H0p, (c+1)*ch*H0p).
        ch = _pick_chunk_rows(hk[i], h0p, tbd, itemsize, z_chunk_bytes)
        n_ch = hk[i] // ch
        w_chunks = jnp.transpose(w3.reshape(s, n_ch, ch * h0p),
                                 (1, 0, 2)).astype(mxu_dtype)
        b_col = jnp.asarray(bias, jnp.float32).reshape(s, 1)
        args += [w_chunks, b_col]
        # Small parameters stay fully VMEM-resident; constant index_map means
        # they are not re-fetched across grid steps.
        in_specs += [pl.BlockSpec(w_chunks.shape, lambda b: (0, 0, 0)),
                     pl.BlockSpec(b_col.shape, lambda b: (0, 0))]

    kernel = functools.partial(_cin_kernel, layer_size=tuple(layer_size),
                               split_half=split_half, featmap=featmap)

    out = pl.pallas_call(
        kernel,
        out_shape=jax.ShapeDtypeStruct((bp, featmap_pad), jnp.float32),
        grid=(steps,),
        in_specs=in_specs,
        out_specs=pl.BlockSpec((tb, featmap_pad), lambda b: (b, 0)),
        compiler_params=pltpu.CompilerParams(
            # "parallel": no-op on 1-TC v5e/v6e; shards batch steps across v7x's 2 TCs.
            dimension_semantics=("parallel",),
            vmem_limit_bytes=_pick_vmem_limit()),
    )(*args)
    return out[:B, :featmap]


# ---------------------------------------------------------------------------
# Pure-JAX reference (mirrors the PyTorch forward) and self-test
# ---------------------------------------------------------------------------

def cin_reference(inputs, weights, biases, layer_size, split_half=True):
    B, H0, D = inputs.shape
    hidden = inputs
    outs = []
    n_layers = len(layer_size)
    for i, size in enumerate(layer_size):
        Hi = hidden.shape[1]
        z = jnp.einsum('bhd,bmd->bhmd', hidden, inputs).reshape(B, Hi * H0, D)
        y = jnp.einsum('sc,bcd->bsd', weights[i], z) + biases[i][None, :, None]
        y = jax.nn.relu(y)
        if split_half and i != n_layers - 1:
            half = size // 2
            hidden, direct = y[:, :half, :], y[:, half:, :]
        else:
            direct = y
            hidden = y
        outs.append(direct)
    return jnp.sum(jnp.concatenate(outs, axis=1), axis=-1)


if __name__ == "__main__":
    def run_case(batch, field_size, embed_dim, layer_size, split_half,
                 mxu_dtype, z_chunk_bytes, rtol, atol):
        field_nums = [field_size]
        for size in layer_size:
            field_nums.append(size // 2 if split_half else size)
        key = jax.random.PRNGKey(0)
        k_x, *k_params = jax.random.split(key, 1 + 2 * len(layer_size))
        x = jax.random.normal(k_x, (batch, field_size, embed_dim), jnp.float32)
        weights, biases = [], []
        for i, size in enumerate(layer_size):
            c = field_nums[i] * field_nums[0]
            w = 0.1 * jax.random.normal(k_params[2 * i], (size, c), jnp.float32)
            b = 0.01 * jax.random.normal(k_params[2 * i + 1], (size,), jnp.float32)
            weights.append(w)
            biases.append(b)
        out = cin_forward(x, weights, biases, layer_size, split_half=split_half,
                          mxu_dtype=mxu_dtype, z_chunk_bytes=z_chunk_bytes)
        out = jax.block_until_ready(out)
        ref = cin_reference(x, weights, biases, layer_size, split_half=split_half)
        assert out.shape == ref.shape, (out.shape, ref.shape)
        err = float(jnp.max(jnp.abs(out - ref)))
        assert jnp.allclose(out, ref, rtol=rtol, atol=atol), err

    # 1) f32 exact path, module-like small shapes (tight tolerance).
    run_case(8, 4, 16, (8, 8), True, jnp.float32, 4 << 20, 1e-4, 2e-4)
    # 2) split_half=False branch, f32 (tight tolerance).
    run_case(8, 4, 16, (8, 8), False, jnp.float32, 4 << 20, 1e-4, 2e-4)
    # 3) Multi-step grid + forced hidden-rows chunking (fori_loop path), f32.
    run_case(64, 8, 8, (32, 16), True, jnp.float32, 32 * 1024, 1e-4, 3e-4)
    # 4) Default bf16 MXU path (bf16 weights/z/direct, f32 accumulation).
    run_case(8, 4, 16, (8, 8), True, jnp.bfloat16, 4 << 20, 5e-2, 5e-2)

    print("KERNEL_OK")
</pallas_src>

<mosaic_0001>
module attributes {stable_mosaic.version = 11 : i64} {
  func.func @_cin_kernel(%arg0: i32, %arg1: memref<8x128xf32, #tpu.memory_space<vmem>>, %arg2: memref<8x128xf32, #tpu.memory_space<vmem>>, %arg3: memref<1x8x64xf32, #tpu.memory_space<vmem>>, %arg4: memref<8x1xf32, #tpu.memory_space<vmem>>, %arg5: memref<1x8x32xf32, #tpu.memory_space<vmem>>, %arg6: memref<8x1xf32, #tpu.memory_space<vmem>>, %arg7: memref<8x128xf32, #tpu.memory_space<vmem>>) attributes {dimension_semantics = [#tpu.dimension_semantics<parallel>], iteration_bounds = array<i64: 1>, scalar_prefetch = 0 : i64, scratch_operands = 0 : i64, tpu.core_type = #tpu.core_type<tc>, window_params = [{transform_indices = @transform_0, window_bounds = array<i64: 8, 128>}, {pipeline_mode = #tpu.pipeline_mode<synchronous>, transform_indices = @transform_1, window_bounds = array<i64: 8, 128>}, {pipeline_mode = #tpu.pipeline_mode<synchronous>, transform_indices = @transform_2, window_bounds = array<i64: 1, 8, 64>}, {pipeline_mode = #tpu.pipeline_mode<synchronous>, transform_indices = @transform_3, window_bounds = array<i64: 8, 1>}, {pipeline_mode = #tpu.pipeline_mode<synchronous>, transform_indices = @transform_4, window_bounds = array<i64: 1, 8, 32>}, {pipeline_mode = #tpu.pipeline_mode<synchronous>, transform_indices = @transform_5, window_bounds = array<i64: 8, 1>}, {transform_indices = @transform_6, window_bounds = array<i64: 8, 128>}]} {
    %c0 = arith.constant 0 : index
    %c0_0 = arith.constant 0 : index
    %0 = vector.load %arg1[%c0, %c0_0] : memref<8x128xf32, #tpu.memory_space<vmem>>, vector<8x128xf32>
    %c0_1 = arith.constant 0 : index
    %c0_2 = arith.constant 0 : index
    %1 = vector.load %arg2[%c0_1, %c0_2] : memref<8x128xf32, #tpu.memory_space<vmem>>, vector<8x128xf32>
    %cst = arith.constant 0.000000e+00 : f32
    %2 = vector.broadcast %cst : f32 to vector<8x116xf32>
    %c0_3 = arith.constant 0 : index
    %c12 = arith.constant 12 : index
    %3 = vector.load %arg7[%c0_3, %c12] : memref<8x128xf32, #tpu.memory_space<vmem>>, vector<8x116xf32>
    tpu.vector_store %arg7[%c0_3, %c12], %2 {strides = array<i32>} : memref<8x128xf32, #tpu.memory_space<vmem>>, vector<8x116xf32>,
    %4 = vector.shape_cast %0 : vector<8x128xf32> to vector<8x1x128xf32>
    %5 = vector.shape_cast %0 : vector<8x128xf32> to vector<1x8x128xf32>
    %6 = vector.broadcast %4 : vector<8x1x128xf32> to vector<8x8x128xf32>
    %7 = vector.broadcast %5 : vector<1x8x128xf32> to vector<8x8x128xf32>
    %8 = arith.mulf %6, %7 : vector<8x8x128xf32>
    %9 = vector.shape_cast %8 : vector<8x8x128xf32> to vector<64x128xf32>
    %c0_4 = arith.constant 0 : index
    %c0_5 = arith.constant 0 : index
    %c0_6 = arith.constant 0 : index
    %10 = vector.load %arg3[%c0_4, %c0_5, %c0_6] : memref<1x8x64xf32, #tpu.memory_space<vmem>>, vector<1x8x64xf32>
    %11 = vector.shape_cast %10 : vector<1x8x64xf32> to vector<8x64xf32>
    %cst_7 = arith.constant dense<0.000000e+00> : vector<8x128xf32>
    %12 = tpu.matmul %11, %9, %cst_7 {dimension_numbers = #tpu.dot_dimension_numbers<[1], [0], [0], [1], [0, 0, 1, 1], [], []>} : vector<8x64xf32>, vector<64x128xf32>, vector<8x128xf32> -> vector<8x128xf32>
    %c0_8 = arith.constant 0 : index
    %c0_9 = arith.constant 0 : index
    %13 = vector.load %arg4[%c0_8, %c0_9] : memref<8x1xf32, #tpu.memory_space<vmem>>, vector<8x1xf32>
    %14 = vector.broadcast %13 : vector<8x1xf32> to vector<8x128xf32>
    %15 = arith.addf %12, %14 : vector<8x128xf32>
    %cst_10 = arith.constant 0.000000e+00 : f32
    %16 = vector.broadcast %cst_10 : f32 to vector<8x128xf32>
    %17 = arith.maximumf %15, %16 : vector<8x128xf32>
    %18 = vector.extract_strided_slice %17 {offsets = [4, 0], sizes = [4, 128], strides = [1, 1]} : vector<8x128xf32> to vector<4x128xf32>
    %19 = vector.extract_strided_slice %17 {offsets = [0, 0], sizes = [4, 128], strides = [1, 1]} : vector<8x128xf32> to vector<4x128xf32>
    %cst_11 = arith.constant dense<0.000000e+00> : vector<8x4xf32>
    %20 = tpu.matmul %1, %18, %cst_11 {dimension_numbers = #tpu.dot_dimension_numbers<[1], [1], [0], [0], [0, 0, 1, 0], [], []>} : vector<8x128xf32>, vector<4x128xf32>, vector<8x4xf32> -> vector<8x4xf32>
    %c0_12 = arith.constant 0 : index
    %c0_13 = arith.constant 0 : index
    %21 = vector.load %arg7[%c0_12, %c0_13] : memref<8x128xf32, #tpu.memory_space<vmem>>, vector<8x4xf32>
    tpu.vector_store %arg7[%c0_12, %c0_13], %20 {strides = array<i32>} : memref<8x128xf32, #tpu.memory_space<vmem>>, vector<8x4xf32>,
    %22 = vector.shape_cast %19 : vector<4x128xf32> to vector<4x1x128xf32>
    %23 = vector.shape_cast %0 : vector<8x128xf32> to vector<1x8x128xf32>
    %24 = vector.broadcast %22 : vector<4x1x128xf32> to vector<4x8x128xf32>
    %25 = vector.broadcast %23 : vector<1x8x128xf32> to vector<4x8x128xf32>
    %26 = arith.mulf %24, %25 : vector<4x8x128xf32>
    %27 = vector.shape_cast %26 : vector<4x8x128xf32> to vector<32x128xf32>
    %c0_14 = arith.constant 0 : index
    %c0_15 = arith.constant 0 : index
    %c0_16 = arith.constant 0 : index
    %28 = vector.load %arg5[%c0_14, %c0_15, %c0_16] : memref<1x8x32xf32, #tpu.memory_space<vmem>>, vector<1x8x32xf32>
    %29 = vector.shape_cast %28 : vector<1x8x32xf32> to vector<8x32xf32>
    %cst_17 = arith.constant dense<0.000000e+00> : vector<8x128xf32>
    %30 = tpu.matmul %29, %27, %cst_17 {dimension_numbers = #tpu.dot_dimension_numbers<[1], [0], [0], [1], [0, 0, 1, 1], [], []>} : vector<8x32xf32>, vector<32x128xf32>, vector<8x128xf32> -> vector<8x128xf32>
    %c0_18 = arith.constant 0 : index
    %c0_19 = arith.constant 0 : index
    %31 = vector.load %arg6[%c0_18, %c0_19] : memref<8x1xf32, #tpu.memory_space<vmem>>, vector<8x1xf32>
    %32 = vector.broadcast %31 : vector<8x1xf32> to vector<8x128xf32>
    %33 = arith.addf %30, %32 : vector<8x128xf32>
    %cst_20 = arith.constant 0.000000e+00 : f32
    %34 = vector.broadcast %cst_20 : f32 to vector<8x128xf32>
    %35 = arith.maximumf %33, %34 : vector<8x128xf32>
    %cst_21 = arith.constant dense<0.000000e+00> : vector<8x8xf32>
    %36 = tpu.matmul %1, %35, %cst_21 {dimension_numbers = #tpu.dot_dimension_numbers<[1], [1], [0], [0], [0, 0, 1, 0], [], []>} : vector<8x128xf32>, vector<8x128xf32>, vector<8x8xf32> -> vector<8x8xf32>
    %c0_22 = arith.constant 0 : index
    %c4 = arith.constant 4 : index
    %37 = vector.load %arg7[%c0_22, %c4] : memref<8x128xf32, #tpu.memory_space<vmem>>, vector<8x8xf32>
    tpu.vector_store %arg7[%c0_22, %c4], %36 {strides = array<i32>} : memref<8x128xf32, #tpu.memory_space<vmem>>, vector<8x8xf32>,
    return
  }
  func.func @transform_0(%arg0: i32) -> (i32, i32) {
    %c0_i32 = arith.constant 0 : i32
    %c0_i32_0 = arith.constant 0 : i32
    return %c0_i32, %arg0 : i32, i32
  }
  func.func @transform_1(%arg0: i32) -> (i32, i32) {
    %c0_i32 = arith.constant 0 : i32
    %c0_i32_0 = arith.constant 0 : i32
    %c0_i32_1 = arith.constant 0 : i32
    return %c0_i32, %c0_i32_0 : i32, i32
  }
  func.func @transform_2(%arg0: i32) -> (i32, i32, i32) {
    %c0_i32 = arith.constant 0 : i32
    %c0_i32_0 = arith.constant 0 : i32
    %c0_i32_1 = arith.constant 0 : i32
    %c0_i32_2 = arith.constant 0 : i32
    return %c0_i32, %c0_i32_0, %c0_i32_1 : i32, i32, i32
  }
  func.func @transform_3(%arg0: i32) -> (i32, i32) {
    %c0_i32 = arith.constant 0 : i32
    %c0_i32_0 = arith.constant 0 : i32
    %c0_i32_1 = arith.constant 0 : i32
    return %c0_i32, %c0_i32_0 : i32, i32
  }
  func.func @transform_4(%arg0: i32) -> (i32, i32, i32) {
    %c0_i32 = arith.constant 0 : i32
    %c0_i32_0 = arith.constant 0 : i32
    %c0_i32_1 = arith.constant 0 : i32
    %c0_i32_2 = arith.constant 0 : i32
    return %c0_i32, %c0_i32_0, %c0_i32_1 : i32, i32, i32
  }
  func.func @transform_5(%arg0: i32) -> (i32, i32) {
    %c0_i32 = arith.constant 0 : i32
    %c0_i32_0 = arith.constant 0 : i32
    %c0_i32_1 = arith.constant 0 : i32
    return %c0_i32, %c0_i32_0 : i32, i32
  }
  func.func @transform_6(%arg0: i32) -> (i32, i32) {
    %c0_i32 = arith.constant 0 : i32
    %c0_i32_0 = arith.constant 0 : i32
    return %arg0, %c0_i32 : i32, i32
  }
}

</mosaic_0001>

<llo_original>
// kernel: tpu_custom_call.1
$region0: #{tpu_custom_call.1}
  #allocation0 [shape = 'u32[]', space=smem, size = 0x4, offset = 0x4, fixed_abs, tag = 'smem constant byte address 0x4 - core index']
  #allocation1 [shape = 'u32[72,128]{1,0:T(1,128)}', space=vmem, size = 0x9000, scoped, tag = 'internal scratch']
  %s0 = inlined_call_operand.vmem [shape: f32[8,128], index: 0, kind: input, shape index: {}]
  %s1 = inlined_call_operand.vmem [shape: f32[8,128], index: 1, kind: input, shape index: {}]
  %s2 = inlined_call_operand.hbm [shape: f32[1,8,64], index: 2, kind: input, shape index: {}]
  %s3 = inlined_call_operand.vmem [shape: f32[8,1], index: 3, kind: input, shape index: {}]
  %s4 = inlined_call_operand.hbm [shape: f32[1,8,32], index: 4, kind: input, shape index: {}]
  %s5 = inlined_call_operand.vmem [shape: f32[8,1], index: 5, kind: input, shape index: {}]
  %s6 = inlined_call_operand.hbm [shape: f32[8,128], index: 6, kind: output, shape index: {}]
  %s7 = sld [smem:[#allocation0]]
  $region42: #{tpu_custom_call.1} parent=0
    _
  %s9 = ssub.s32 1, %s7
  %s10 = scalar_select 0, %s9, %s7
  $region1: #{tpu_custom_call.1} parent=0
    #allocation2 [shape = 'u8[4096]{0}', space=vmem, size = 0x1000, scoped, tag = 'input window, operand 2, single buffered']
    #allocation3 [shape = 's32[1]{0}', space=sflag, size = 0x4, scoped, tag = 'scoped memory for tpu_custom_call.1']
    #allocation4 [shape = 's32[1]{0}', space=sflag, size = 0x4, scoped, tag = 'scoped memory for tpu_custom_call.1']
    #allocation5 [shape = 'u8[4096]{0}', space=vmem, size = 0x1000, scoped, tag = 'input window, operand 4, single buffered']
    #allocation6 [shape = 's32[1]{0}', space=sflag, size = 0x4, scoped, tag = 'scoped memory for tpu_custom_call.1']
    #allocation7 [shape = 'u8[4096]{0}', space=vmem, size = 0x1000, scoped, tag = 'output window, operand 0, single buffered']
    %11 = vsyncpa [#allocation3], 0
    %12 = vsyncpa [#allocation6], 0
    %13 = vsyncpa [#allocation4], 0
    // Predicated region
    $region2: #{tpu_custom_call.1} parent=1 // pred_check
      _
    $region3: #{tpu_custom_call.1} parent=1 // pred_check_branch
      %15 = sbr.rel (0) target = $region5
    $region4: #{tpu_custom_call.1} parent=1 // pred_region
      _
    $region5: #{tpu_custom_call.1} parent=1 // pred_fallthru
      _
    // Predicated region
    $region6: #{tpu_custom_call.1} parent=1 // pred_check
      _
    $region7: #{tpu_custom_call.1} parent=1 // pred_check_branch
      %17 = sbr.rel (0) target = $region9
    $region8: #{tpu_custom_call.1} parent=1 // pred_region
      _
    $region9: #{tpu_custom_call.1} parent=1 // pred_fallthru
      _
    // Predicated region
    $region10: #{tpu_custom_call.1} parent=1 // pred_check
      _
    $region11: #{tpu_custom_call.1} parent=1 // pred_check_branch
      %19 = sbr.rel (0) target = $region13
    $region12: #{tpu_custom_call.1} parent=1 // pred_region
      %21 = vsyncadd [#allocation3], 0
      %s23 = sshll.u32 %s2, 4
      %s24 = int_to_ptr.hbm [resolvable:$true] %s23
      %s25 = sshll.u32 [#allocation2], 4
      %s26 = int_to_ptr.vmem [resolvable:$true] %s25
      %28 = dma.hbm_to_vmem [thread:$0]  %s24, 128, %s26, [#allocation3]
    $region13: #{tpu_custom_call.1} parent=1 // pred_fallthru
      _
    // Predicated region
    $region14: #{tpu_custom_call.1} parent=1 // pred_check
      _
    $region15: #{tpu_custom_call.1} parent=1 // pred_check_branch
      %30 = sbr.rel (0) target = $region17
    $region16: #{tpu_custom_call.1} parent=1 // pred_region
      _
    $region17: #{tpu_custom_call.1} parent=1 // pred_fallthru
      _
    // Predicated region
    $region18: #{tpu_custom_call.1} parent=1 // pred_check
      _
    $region19: #{tpu_custom_call.1} parent=1 // pred_check_branch
      %32 = sbr.rel (0) target = $region21
    $region20: #{tpu_custom_call.1} parent=1 // pred_region
      %34 = vsyncadd [#allocation6], 0
      %s36 = sshll.u32 %s4, 4
      %s37 = int_to_ptr.hbm [resolvable:$true] %s36
      %s38 = sshll.u32 [#allocation5], 4
      %s39 = int_to_ptr.vmem [resolvable:$true] %s38
      %41 = dma.hbm_to_vmem [thread:$0]  %s37, 128, %s39, [#allocation6]
    $region21: #{tpu_custom_call.1} parent=1 // pred_fallthru
      _
    // Predicated region
    $region22: #{tpu_custom_call.1} parent=1 // pred_check
      _
    $region23: #{tpu_custom_call.1} parent=1 // pred_check_branch
      %43 = sbr.rel (0) target = $region25
    $region24: #{tpu_custom_call.1} parent=1 // pred_region
      _
    $region25: #{tpu_custom_call.1} parent=1 // pred_fallthru
      _
    // Predicated region
    $region26: #{tpu_custom_call.1} parent=1 // pred_check
      _
    $region27: #{tpu_custom_call.1} parent=1 // pred_check_branch
      %45 = sbr.rel (0) target = $region29
    $region28: #{tpu_custom_call.1} parent=1 // pred_region
      %47 = dma.done [#allocation3], 128
    $region29: #{tpu_custom_call.1} parent=1 // pred_fallthru
      _
    // Predicated region
    $region30: #{tpu_custom_call.1} parent=1 // pred_check
      _
    $region31: #{tpu_custom_call.1} parent=1 // pred_check_branch
      %49 = sbr.rel (0) target = $region33
    $region32: #{tpu_custom_call.1} parent=1 // pred_region
      %51 = dma.done [#allocation6], 128
    $region33: #{tpu_custom_call.1} parent=1 // pred_fallthru
      _
    %v52 = vld [vmem:[%s0] sm:$0xff]
    %v53 = vld [vmem:[%s1] sm:$0xff]
    %vm54 = vcmask 1047648
    %55 = vst.msk [vmem:[#allocation7] sm:$0xff] %vm54, 0.0
    %v57 = vrot.slane %v52, 1
    %v58 = vrot.slane %v52, 2
    %v59 = vrot.slane %v52, 3
    %v60 = vrot.slane %v52, 4
    %v61 = vrot.slane %v52, 5
    %v62 = vrot.slane %v52, 6
    %v63 = vrot.slane %v52, 7
    %v64 = vperm.slane %v52, 0
    %v65 = vperm.slane %v57, 0
    %v66 = vperm.slane %v58, 0
    %v67 = vperm.slane %v59, 0
    %v68 = vperm.slane %v60, 0
    %v69 = vperm.slane %v61, 0
    %v70 = vperm.slane %v62, 0
    %v71 = vperm.slane %v63, 0
    %v80 = vmul.f32 %v64, %v52
    %v81 = vmul.f32 %v65, %v52
    %v82 = vmul.f32 %v66, %v52
    %v83 = vmul.f32 %v67, %v52
    %v84 = vmul.f32 %v68, %v52
    %v85 = vmul.f32 %v69, %v52
    %v86 = vmul.f32 %v70, %v52
    %v87 = vmul.f32 %v71, %v52
    %v88 = vld [vmem:[#allocation2] sm:$0xff]
    %v89 = vld [vmem:[%s3] sm:$0xff]
    %91 = vset.pattern.permute.xlu0 0
    %92 = vperm.xlu0 %91, %v89
    %v93 = vpop.permute.xlu0 %92
    %vm95 = vcmask 523264
    %v97 = vsel %vm95, %v88, 0
    %99 = vmatpush.msra.mxu0 0.0
    %100 = vmatpush.msra.mxu0 0.0
    %101 = vmatpush.msra.mxu0 0.0
    %102 = vmatpush.msra.mxu0 0.0
    %103 = vmatpush.msra.mxu0 0.0
    %104 = vmatpush.msra.mxu0 0.0
    %105 = vmatpush.msra.mxu0 0.0
    %106 = vmatpush.msra.mxu0 0.0
    %107 = vmatpush.msra.mxu0 %v87
    %108 = vmatpush.msra.mxu0 %v86
    %109 = vmatpush.msra.mxu0 %v85
    %110 = vmatpush.msra.mxu0 %v84
    %111 = vmatpush.msra.mxu0 %v83
    %112 = vmatpush.msra.mxu0 %v82
    %113 = vmatpush.msra.mxu0 %v81
    %114 = vmatpush.msra.mxu0 %v80
    %115 = vmatmul.f32.gmra.mxu0 %v97
    %v116 = vpop.f32.mrf.mxu0
    %v117 = vadd.f32 %v93, %v116
    %118 = vdwg.mxu0
    %v119 = vmax.f32 %v117, 0.0
    %v121 = vrot.slane %v119, 4
    %123 = vmatpush.xpose.msra.mxu0 0.0
    %124 = vmatpush.xpose.msra.mxu0 0.0
    %125 = vmatpush.xpose.msra.mxu0 0.0
    %126 = vmatpush.xpose.msra.mxu0 0.0
    %127 = vmatpush.xpose.msra.mxu0 0.0
    %128 = vmatpush.xpose.msra.mxu0 0.0
    %129 = vmatpush.xpose.msra.mxu0 0.0
    %130 = vmatpush.xpose.msra.mxu0 0.0
    %131 = vmatpush.xpose.msra.mxu0 0.0
    %132 = vmatpush.xpose.msra.mxu0 0.0
    %133 = vmatpush.xpose.msra.mxu0 0.0
    %134 = vmatpush.xpose.msra.mxu0 0.0
    %135 = vmatpush.xpose.msra.mxu0 0.0
    %136 = vmatpush.xpose.msra.mxu0 0.0
    %137 = vmatpush.xpose.msra.mxu0 0.0
    %138 = vmatpush.xpose.msra.mxu0 %v121
    %139 = vmatmul.f32.gmra.mxu0 %v53
    %v140 = vpop.f32.mrf.mxu0
    %v141 = vadd.f32 0.0, %v140
    %142 = vdwg.mxu0
    %vm143 = vcmask 31744
    %144 = vst.msk [vmem:[#allocation7] sm:$0xff] %vm143, %v141
    %v145 = vrot.slane %v119, 1
    %v146 = vrot.slane %v119, 2
    %v147 = vrot.slane %v119, 3
    %v148 = vperm.slane %v119, 0
    %v149 = vperm.slane %v145, 0
    %v150 = vperm.slane %v146, 0
    %v151 = vperm.slane %v147, 0
    %v156 = vmul.f32 %v148, %v52
    %v157 = vmul.f32 %v149, %v52
    %v158 = vmul.f32 %v150, %v52
    %v159 = vmul.f32 %v151, %v52
    %v160 = vld [vmem:[#allocation5] sm:$0xff]
    %v161 = vld [vmem:[%s5] sm:$0xff]
    %163 = vset.pattern.permute.xlu0 0
    %164 = vperm.xlu0 %163, %v161
    %v165 = vpop.permute.xlu0 %164
    %vm167 = vcmask 261120
    %v169 = vsel %vm167, %v160, 0
    %171 = vmatpush.msra.mxu0 0.0
    %172 = vmatpush.msra.mxu0 0.0
    %173 = vmatpush.msra.mxu0 0.0
    %174 = vmatpush.msra.mxu0 0.0
    %175 = vmatpush.msra.mxu0 0.0
    %176 = vmatpush.msra.mxu0 0.0
    %177 = vmatpush.msra.mxu0 0.0
    %178 = vmatpush.msra.mxu0 0.0
    %179 = vmatpush.msra.mxu0 0.0
    %180 = vmatpush.msra.mxu0 0.0
    %181 = vmatpush.msra.mxu0 0.0
    %182 = vmatpush.msra.mxu0 0.0
    %183 = vmatpush.msra.mxu0 %v159
    %184 = vmatpush.msra.mxu0 %v158
    %185 = vmatpush.msra.mxu0 %v157
    %186 = vmatpush.msra.mxu0 %v156
    %187 = vmatmul.f32.gmra.mxu0 %v169
    %v188 = vpop.f32.mrf.mxu0
    %v189 = vadd.f32 %v165, %v188
    %190 = vdwg.mxu0
    %v191 = vmax.f32 %v189, 0.0
    %192 = vmatpush.xpose.msra.mxu0 0.0
    %193 = vmatpush.xpose.msra.mxu0 0.0
    %194 = vmatpush.xpose.msra.mxu0 0.0
    %195 = vmatpush.xpose.msra.mxu0 0.0
    %196 = vmatpush.xpose.msra.mxu0 0.0
    %197 = vmatpush.xpose.msra.mxu0 0.0
    %198 = vmatpush.xpose.msra.mxu0 0.0
    %199 = vmatpush.xpose.msra.mxu0 0.0
    %200 = vmatpush.xpose.msra.mxu0 0.0
    %201 = vmatpush.xpose.msra.mxu0 0.0
    %202 = vmatpush.xpose.msra.mxu0 0.0
    %203 = vmatpush.xpose.msra.mxu0 0.0
    %204 = vmatpush.xpose.msra.mxu0 0.0
    %205 = vmatpush.xpose.msra.mxu0 0.0
    %206 = vmatpush.xpose.msra.mxu0 0.0
    %207 = vmatpush.xpose.msra.mxu0 %v191
    %208 = vmatmul.f32.gmra.mxu0 %v53
    %v209 = vpop.f32.mrf.mxu0
    %v210 = vadd.f32 0.0, %v209
    %211 = vdwg.mxu0
    %213 = vrot.lane.b32.xlu0 %v210, 4
    %v214 = vpop.permute.xlu0 %213
    %vm216 = vcmask 97312
    %217 = vst.msk [vmem:[#allocation7] sm:$0xff] %vm216, %v214
    // Predicated region
    $region34: #{tpu_custom_call.1} parent=1 // pred_check
      _
    $region35: #{tpu_custom_call.1} parent=1 // pred_check_branch
      %219 = sbr.rel (0) target = $region37
    $region36: #{tpu_custom_call.1} parent=1 // pred_region
      %221 = vsyncadd [#allocation4], 0
      %s223 = sshll.u32 [#allocation7], 4
      %s224 = int_to_ptr.vmem [resolvable:$true] %s223
      %s225 = sshll.u32 %s6, 4
      %s226 = int_to_ptr.hbm [resolvable:$true] %s225
      %228 = dma.vmem_to_hbm [thread:$0]  %s224, 128, %s226, [#allocation4]
    $region37: #{tpu_custom_call.1} parent=1 // pred_fallthru
      _
    // Predicated region
    $region38: #{tpu_custom_call.1} parent=1 // pred_check
      _
    $region39: #{tpu_custom_call.1} parent=1 // pred_check_branch
      %230 = sbr.rel (0) target = $region41
    $region40: #{tpu_custom_call.1} parent=1 // pred_region
      %232 = dma.done [#allocation4], 128
    $region41: #{tpu_custom_call.1} parent=1 // pred_fallthru
      _
    %233 = vsyncpa [#allocation3], 1
    %234 = vsyncpa [#allocation6], 1
    %235 = vsyncpa [#allocation4], 1

</llo_original>
